<compile_context>
chip_gen: v5e
topology: v5e:2x2
jax: 0.10.0
libtpu: 0.0.40
codegen_flags: <defaults>
</compile_context>

<pallas_src>
import jax
import jax.numpy as jnp
from jax.experimental import pallas as pl
from jax.experimental.pallas import tpu as pltpu


def eca1d_kernel(x_ref, wmat_ref, o_ref):
    # x_ref:    (1, N, C) input slab of one batch element
    # wmat_ref: (C, C) transposed banded conv matrix, pre-scaled by 1/N
    # o_ref:    (1, N, C) output slab
    x = x_ref[0]                                            # (N, C) f32
    # Token reduction (XLU cross-sublane sum). The 1/N mean factor is already
    # folded into the band matrix, so no extra VPU multiply here.
    s = jnp.sum(x, axis=0, keepdims=True)                   # (1, C)
    # k-tap cross-correlation over channels == matvec with a banded matrix (MXU).
    z = jnp.dot(s, wmat_ref[...], preferred_element_type=jnp.float32)  # (1, C)
    gate = jax.nn.sigmoid(z)                                # exp/recip -> EUP slot
    # Broadcast the per-channel gate over tokens; single lane-dense store.
    o_ref[0] = (x * gate).astype(o_ref.dtype)


def eca_layer_1d_forward(x, conv_w, k_size):
    """x: (B, N, C) float32, conv_w: (k,) Conv1d(1,1,k,bias=False) weight."""
    B, N, C = x.shape
    k = int(k_size)
    pad = (k - 1) // 2

    # Dense banded matrix of the zero-padded 1D cross-correlation, with the
    # 1/N mean factor folded in:
    #   band[c_out, c_in] = w[c_in - c_out + pad] / N   if 0 <= c_in-c_out+pad < k
    co = jnp.arange(C)[:, None]
    ci = jnp.arange(C)[None, :]
    j = ci - co + pad
    band = jnp.where(
        (j >= 0) & (j < k),
        conv_w.astype(jnp.float32)[jnp.clip(j, 0, k - 1)],
        jnp.zeros((), jnp.float32),
    ) * (1.0 / N)                                           # (C, C)
    band_t = band.T                                         # (C, C), rhs of matvec

    x = x.astype(jnp.float32)

    out = pl.pallas_call(
        eca1d_kernel,
        out_shape=jax.ShapeDtypeStruct((B, N, C), jnp.float32),
        grid_spec=pltpu.PrefetchScalarGridSpec(
            num_scalar_prefetch=0,
            grid=(B,),
            in_specs=[
                # full (N, C) slab of one batch element per step
                pl.BlockSpec((1, N, C), lambda b: (b, 0, 0)),
                # constant index_map -> conv matrix DMA'd once, VMEM-resident
                pl.BlockSpec((C, C), lambda b: (0, 0)),
            ],
            out_specs=pl.BlockSpec((1, N, C), lambda b: (b, 0, 0)),
        ),
        compiler_params=pltpu.CompilerParams(
            dimension_semantics=("parallel",)),
    )(x, band_t)
    return out


def reference(x, conv_w, k_size):
    """Pure-jnp mirror of the PyTorch eca_layer_1d forward."""
    B, N, C = x.shape
    k = int(k_size)
    pad = (k - 1) // 2
    m = jnp.mean(x, axis=1)                                 # (B, C)
    mp = jnp.pad(m, ((0, 0), (pad, pad)))
    z = sum(conv_w[j] * mp[:, j:j + C] for j in range(k))   # cross-correlation
    gate = jax.nn.sigmoid(z)
    return x * gate[:, None, :]


if __name__ == "__main__":
    # Small shapes consistent with the module: x is (batch, tokens, channels).
    # C is a multiple of 128 so all stores are lane-dense (unmasked vst).
    B, N, C = 2, 64, 128
    k_size = 3

    key = jax.random.PRNGKey(0)
    kx, kw = jax.random.split(key, 2)
    x = jax.random.normal(kx, (B, N, C), jnp.float32)
    # Conv1d(1, 1, k_size, bias=False) weight, flattened to (k,)
    conv_w = jax.random.normal(kw, (k_size,), jnp.float32) * 0.5

    out = eca_layer_1d_forward(x, conv_w, k_size)
    out = jax.block_until_ready(out)

    ref = reference(x, conv_w, k_size)
    assert out.shape == (B, N, C)
    assert jnp.allclose(out, ref, atol=1e-4, rtol=1e-4), \
        f"max abs err {jnp.max(jnp.abs(out - ref))}"

    print("KERNEL_OK")
</pallas_src>

<mosaic_0001>
module attributes {stable_mosaic.version = 11 : i64} {
  func.func @eca1d_kernel(%arg0: i32, %arg1: memref<1x64x128xf32, #tpu.memory_space<vmem>>, %arg2: memref<128x128xf32, #tpu.memory_space<vmem>>, %arg3: memref<1x64x128xf32, #tpu.memory_space<vmem>>) attributes {dimension_semantics = [#tpu.dimension_semantics<parallel>], iteration_bounds = array<i64: 2>, scalar_prefetch = 0 : i64, scratch_operands = 0 : i64, tpu.core_type = #tpu.core_type<tc>, window_params = [{transform_indices = @transform_0, window_bounds = array<i64: 1, 64, 128>}, {pipeline_mode = #tpu.pipeline_mode<synchronous>, transform_indices = @transform_1, window_bounds = array<i64: 128, 128>}, {transform_indices = @transform_2, window_bounds = array<i64: 1, 64, 128>}]} {
    %c0 = arith.constant 0 : index
    %c0_0 = arith.constant 0 : index
    %c0_1 = arith.constant 0 : index
    %0 = vector.load %arg1[%c0, %c0_0, %c0_1] : memref<1x64x128xf32, #tpu.memory_space<vmem>>, vector<1x64x128xf32>
    %1 = vector.shape_cast %0 : vector<1x64x128xf32> to vector<64x128xf32>
    %cst = arith.constant dense<0.000000e+00> : vector<128xf32>
    %2 = vector.multi_reduction <add>, %1, %cst [0] : vector<64x128xf32> to vector<128xf32>
    %3 = vector.shape_cast %2 : vector<128xf32> to vector<1x128xf32>
    %c0_2 = arith.constant 0 : index
    %c0_3 = arith.constant 0 : index
    %4 = vector.load %arg2[%c0_2, %c0_3] : memref<128x128xf32, #tpu.memory_space<vmem>>, vector<128x128xf32>
    %cst_4 = arith.constant dense<0.000000e+00> : vector<1x128xf32>
    %5 = tpu.matmul %3, %4, %cst_4 {dimension_numbers = #tpu.dot_dimension_numbers<[1], [0], [0], [1], [0, 0, 1, 1], [], []>} : vector<1x128xf32>, vector<128x128xf32>, vector<1x128xf32> -> vector<1x128xf32>
    %6 = arith.negf %5 : vector<1x128xf32>
    %7 = math.exp %6 : vector<1x128xf32>
    %cst_5 = arith.constant 1.000000e+00 : f32
    %8 = vector.broadcast %cst_5 : f32 to vector<1x128xf32>
    %9 = arith.addf %8, %7 : vector<1x128xf32>
    %10 = arith.divf %8, %9 : vector<1x128xf32>
    %11 = vector.broadcast %10 : vector<1x128xf32> to vector<64x128xf32>
    %12 = arith.mulf %1, %11 : vector<64x128xf32>
    %c0_6 = arith.constant 0 : index
    %c0_7 = arith.constant 0 : index
    %c0_8 = arith.constant 0 : index
    %13 = vector.load %arg3[%c0_6, %c0_7, %c0_8] : memref<1x64x128xf32, #tpu.memory_space<vmem>>, vector<1x64x128xf32>
    %14 = vector.shape_cast %13 : vector<1x64x128xf32> to vector<64x128xf32>
    %15 = vector.shape_cast %12 : vector<64x128xf32> to vector<1x64x128xf32>
    tpu.vector_store %arg3[%c0_6, %c0_7, %c0_8], %15 {strides = array<i32>} : memref<1x64x128xf32, #tpu.memory_space<vmem>>, vector<1x64x128xf32>,
    return
  }
  func.func @transform_0(%arg0: i32) -> (i32, i32, i32) {
    %c0_i32 = arith.constant 0 : i32
    %c0_i32_0 = arith.constant 0 : i32
    %c0_i32_1 = arith.constant 0 : i32
    return %arg0, %c0_i32, %c0_i32_0 : i32, i32, i32
  }
  func.func @transform_1(%arg0: i32) -> (i32, i32) {
    %c0_i32 = arith.constant 0 : i32
    %c0_i32_0 = arith.constant 0 : i32
    %c0_i32_1 = arith.constant 0 : i32
    return %c0_i32, %c0_i32_0 : i32, i32
  }
  func.func @transform_2(%arg0: i32) -> (i32, i32, i32) {
    %c0_i32 = arith.constant 0 : i32
    %c0_i32_0 = arith.constant 0 : i32
    %c0_i32_1 = arith.constant 0 : i32
    return %arg0, %c0_i32, %c0_i32_0 : i32, i32, i32
  }
}

</mosaic_0001>

<llo_original>
// kernel: tpu_custom_call.1
$region0: #{tpu_custom_call.1}
  #allocation0 [shape = 'u32[]', space=smem, size = 0x4, offset = 0x4, fixed_abs, tag = 'smem constant byte address 0x4 - core index']
  #allocation1 [shape = 'u32[72,128]{1,0:T(1,128)}', space=vmem, size = 0x9000, scoped, tag = 'internal scratch']
  %s0 = inlined_call_operand.hbm [shape: f32[2,64,128], index: 0, kind: input, shape index: {}]
  %s1 = inlined_call_operand.hbm [shape: f32[128,128], index: 1, kind: input, shape index: {}]
  %s2 = inlined_call_operand.hbm [shape: f32[2,64,128], index: 2, kind: output, shape index: {}]
  %s3 = sld [smem:[#allocation0]]
  $region49: #{tpu_custom_call.1} parent=0
    _
  %s5 = ssub.s32 1, %s3
  %s6 = scalar_select 0, %s5, %s3
  $region1: #{tpu_custom_call.1} parent=0
    #allocation2 [shape = 'u8[65536]{0}', space=vmem, size = 0x10000, scoped, tag = 'input window, operand 0']
    #allocation3 [shape = 's32[2]{0}', space=sflag, size = 0x8, scoped, tag = 'scoped memory for tpu_custom_call.1']
    #allocation4 [shape = 's32[2]{0}', space=sflag, size = 0x8, scoped, tag = 'scoped memory for tpu_custom_call.1']
    #allocation5 [shape = 'u8[65536]{0}', space=vmem, size = 0x10000, scoped, tag = 'input window, operand 1, single buffered']
    #allocation6 [shape = 's32[1]{0}', space=sflag, size = 0x4, scoped, tag = 'scoped memory for tpu_custom_call.1']
    #allocation7 [shape = 'u8[65536]{0}', space=vmem, size = 0x10000, scoped, tag = 'output window, operand 0']
    %7 = vsyncpa [#allocation3], 0
    %s8 = scalar_lea.sflag [#allocation3], 1
    %9 = vsyncpa %s8, 0
    %10 = vsyncpa [#allocation6], 0
    %11 = vsyncpa [#allocation4], 0
    %s12 = scalar_lea.sflag [#allocation4], 1
    %13 = vsyncpa %s12, 0
    loop: start=0, step=1, limit=4
    $region2: #{tpu_custom_call.1} parent=1 // loop_pre_header
      _
    $region3: #{tpu_custom_call.1} parent=1 // loop_header
      %s15 = sphi 0, %s19
      %p16 = scmp.ge.s32.totalorder %s15, 4
      %s25 = sphi 0, %s27
      %s28 = sphi 0, %s25
      %s29 = sphi 0, %s28
      %s45 = sphi 0, %s29
      %s49 = sphi 0, %s49
      %s51 = sphi 0, %s49
      %s52 = sphi 0, %s51
      %s66 = sphi 0, %s52
      %s72 = sphi 0, %s74
      %s75 = sphi 0, %s72
      %s76 = sphi 0, %s75
      %s92 = sphi 0, %s76
    $region4: #{tpu_custom_call.1} parent=1 // loop_header_branch
      %18 = sbr.rel (%p16) target = $region8
    $region5: #{tpu_custom_call.1} parent=1 // loop_body
      %s20 = ssub.s32 %s15, 1
      %s21 = ssub.s32 %s15, 2
      %s22 = sadd.s32 %s15, 1
      %s23 = ssub.s32 %s15, %s22
      %p24 = scmp.eq.s32.totalorder %s23, 0
      %s26 = sadd.s32 %s25, 1
      %s27 = scalar_select %p24, %s25, %s26
      %p30 = pneg %p24
      %p31 = scmp.eq.s32.totalorder %s15, 1
      %p32 = por %p30, %p31
      %p33 = scmp.ne.s32.totalorder %s25, %s28
      %p34 = scmp.eq.s32.totalorder %s15, 0
      %p35 = por %p33, %p34
      %p36 = scmp.ne.s32.totalorder %s25, %s28
      %p37 = scmp.eq.s32.totalorder %s20, 1
      %p38 = por %p36, %p37
      %p39 = scmp.ne.s32.totalorder %s28, %s29
      %p40 = scmp.eq.s32.totalorder %s20, 0
      %p41 = por %p39, %p40
      %p42 = scmp.ne.s32.totalorder %s28, %s29
      %p43 = scmp.eq.s32.totalorder %s21, 1
      %p44 = por %p42, %p43
      %p46 = scmp.ne.s32.totalorder %s29, %s45
      %p47 = scmp.eq.s32.totalorder %s21, 0
      %p48 = por %p46, %p47
      %s50 = sadd.s32 %s49, 1
      %p53 = scmp.eq.s32.totalorder %s15, 1
      %p54 = scmp.ne.s32.totalorder %s49, %s51
      %p55 = scmp.eq.s32.totalorder %s15, 0
      %p56 = por %p54, %p55
      %p57 = scmp.ne.s32.totalorder %s49, %s51
      %p58 = scmp.eq.s32.totalorder %s20, 1
      %p59 = por %p57, %p58
      %p60 = scmp.ne.s32.totalorder %s51, %s52
      %p61 = scmp.eq.s32.totalorder %s20, 0
      %p62 = por %p60, %p61
      %p63 = scmp.ne.s32.totalorder %s51, %s52
      %p64 = scmp.eq.s32.totalorder %s21, 1
      %p65 = por %p63, %p64
      %p67 = scmp.ne.s32.totalorder %s52, %s66
      %p68 = scmp.eq.s32.totalorder %s21, 0
      %p69 = por %p67, %p68
      %s70 = ssub.s32 %s15, %s22
      %p71 = scmp.eq.s32.totalorder %s70, 0
      %s73 = sadd.s32 %s72, 1
      %s74 = scalar_select %p71, %s72, %s73
      %p77 = pneg %p71
      %p78 = scmp.eq.s32.totalorder %s15, 1
      %p79 = por %p77, %p78
      %p80 = scmp.ne.s32.totalorder %s72, %s75
      %p81 = scmp.eq.s32.totalorder %s15, 0
      %p82 = por %p80, %p81
      %p83 = scmp.ne.s32.totalorder %s72, %s75
      %p84 = scmp.eq.s32.totalorder %s20, 1
      %p85 = por %p83, %p84
      %p86 = scmp.ne.s32.totalorder %s75, %s76
      %p87 = scmp.eq.s32.totalorder %s20, 0
      %p88 = por %p86, %p87
      %p89 = scmp.ne.s32.totalorder %s75, %s76
      %p90 = scmp.eq.s32.totalorder %s21, 1
      %p91 = por %p89, %p90
      %p93 = scmp.ne.s32.totalorder %s76, %s92
      %p94 = scmp.eq.s32.totalorder %s21, 0
      %p95 = por %p93, %p94
      %p96 = scmp.le.s32.totalorder 1, %s15
      %p97 = scmp.lt.s32.totalorder %s15, 3
      %p98 = pnand %p96, %p97
      %p99 = pneg %p98
      // Predicated region
      $region9: #{tpu_custom_call.1} parent=5 // pred_check
        _
      $region10: #{tpu_custom_call.1} parent=5 // pred_check_branch
        %101 = sbr.rel (%p98) target = $region12
      $region11: #{tpu_custom_call.1} parent=5 // pred_region
        %s102 = ssub.s32 %s15, 1
        // Predicated region
        $region13: #{tpu_custom_call.1} parent=11 // pred_check
          %p103 = pneg %p62
        $region14: #{tpu_custom_call.1} parent=11 // pred_check_branch
          %105 = sbr.rel (%p103) target = $region16
        $region15: #{tpu_custom_call.1} parent=11 // pred_region
          %107 = vsyncadd [#allocation6], 0
          %s108 = sshll.u32 %s1, 4
          %s109 = int_to_ptr.hbm [resolvable:$true] %s108
          %s110 = sshll.u32 [#allocation5], 4
          %s111 = int_to_ptr.vmem [resolvable:$true] %s110
          %116 = dma.hbm_to_vmem [thread:$0]  %s109, 2048, %s111, [#allocation6], 128, 128, 8
        $region16: #{tpu_custom_call.1} parent=11 // pred_fallthru
          _
      $region12: #{tpu_custom_call.1} parent=5 // pred_fallthru
        _
      %p117 = scmp.lt.s32.totalorder %s15, 2
      // Predicated region
      $region17: #{tpu_custom_call.1} parent=5 // pred_check
        %p118 = pneg %p117
      $region18: #{tpu_custom_call.1} parent=5 // pred_check_branch
        %120 = sbr.rel (%p118) target = $region20
      $region19: #{tpu_custom_call.1} parent=5 // pred_region
        // Predicated region
        $region21: #{tpu_custom_call.1} parent=19 // pred_check
          %p121 = pneg %p35
        $region22: #{tpu_custom_call.1} parent=19 // pred_check_branch
          %123 = sbr.rel (%p121) target = $region24
        $region23: #{tpu_custom_call.1} parent=19 // pred_region
          %s124 = sand.u32 %s25, 1
          %s125 = scalar_lea.sflag [#allocation3], %s124
          %s126 = sand.u32 %s25, 1
          %s127 = smul.addr %s126, 64
          %s128 = scalar_lea.vmem [#allocation2], %s127
          %130 = vsyncadd %s125, 0
          %s131 = smul.addr %s15, 8
          %s132 = smul.addr %s131, 8
          %s133 = scalar_lea.hbm %s0, %s132
          %s134 = sshll.u32 %s133, 4
          %s135 = int_to_ptr.hbm [resolvable:$true] %s134
          %s136 = sshll.u32 %s128, 4
          %s137 = int_to_ptr.vmem [resolvable:$true] %s136
          %142 = dma.hbm_to_vmem [thread:$0]  %s135, 1024, %s137, %s125, 128, 128, 8
        $region24: #{tpu_custom_call.1} parent=19 // pred_fallthru
          _
      $region20: #{tpu_custom_call.1} parent=5 // pred_fallthru
        _
      %p143 = scmp.le.s32.totalorder 1, %s15
      %p144 = scmp.lt.s32.totalorder %s15, 3
      %p145 = pnand %p143, %p144
      %p146 = pneg %p145
      // Predicated region
      $region25: #{tpu_custom_call.1} parent=5 // pred_check
        _
      $region26: #{tpu_custom_call.1} parent=5 // pred_check_branch
        %148 = sbr.rel (%p145) target = $region28
      $region27: #{tpu_custom_call.1} parent=5 // pred_region
        %s149 = ssub.s32 %s15, 1
        %s150 = sand.u32 %s28, 1
        %s151 = scalar_lea.sflag [#allocation3], %s150
        %s152 = sand.u32 %s28, 1
        %s153 = smul.addr %s152, 64
        %s154 = scalar_lea.vmem [#allocation2], %s153
        // Predicated region
        $region29: #{tpu_custom_call.1} parent=27 // pred_check
          %p155 = pneg %p41
        $region30: #{tpu_custom_call.1} parent=27 // pred_check_branch
          %157 = sbr.rel (%p155) target = $region32
        $region31: #{tpu_custom_call.1} parent=27 // pred_region
          %159 = dma.done %s151, 1024
        $region32: #{tpu_custom_call.1} parent=27 // pred_fallthru
          _
        // Predicated region
        $region33: #{tpu_custom_call.1} parent=27 // pred_check
          %p160 = pneg %p62
        $region34: #{tpu_custom_call.1} parent=27 // pred_check_branch
          %162 = sbr.rel (%p160) target = $region36
        $region35: #{tpu_custom_call.1} parent=27 // pred_region
          %164 = dma.done [#allocation6], 2048
        $region36: #{tpu_custom_call.1} parent=27 // pred_fallthru
          _
        %s165 = sand.u32 %s28, 1
        %s166 = scalar_lea.sflag [#allocation3], %s165
        %s167 = sand.u32 %s28, 1
        %s168 = smul.addr %s167, 64
        %s169 = scalar_lea.vmem [#allocation2], %s168
        %p170 = pneg %p41
        %p171 = pneg %p38
        %p172 = pneg %p62
        %p173 = pneg %p59
        %p174 = pneg %p88
        %p175 = pneg %p85
        %s176 = sand.u32 %s75, 1
        %s177 = scalar_lea.sflag [#allocation4], %s176
        %s178 = sand.u32 %s75, 1
        %s179 = smul.addr %s178, 64
        %s180 = scalar_lea.vmem [#allocation7], %s179
        %v181 = vld [vmem:[%s154] sm:$0xff]
        %v182 = vld [vmem:[%s154 + $0x8] sm:$0xff]
        %v183 = vld [vmem:[%s154 + $0x10] sm:$0xff]
        %v184 = vld [vmem:[%s154 + $0x18] sm:$0xff]
        %v185 = vld [vmem:[%s154 + $0x20] sm:$0xff]
        %v186 = vld [vmem:[%s154 + $0x28] sm:$0xff]
        %v187 = vld [vmem:[%s154 + $0x30] sm:$0xff]
        %v188 = vld [vmem:[%s154 + $0x38] sm:$0xff]
        %v189 = vadd.f32 %v181, %v182
        %v190 = vadd.f32 %v189, %v183
        %v191 = vadd.f32 %v190, %v184
        %v192 = vadd.f32 %v191, %v185
        %v193 = vadd.f32 %v192, %v186
        %v194 = vadd.f32 %v193, %v187
        %v195 = vadd.f32 %v194, %v188
        %v196 = vrot.slane %v195, 4
        %v197 = vadd.f32 %v195, %v196
        %v198 = vrot.slane %v197, 2
        %v199 = vadd.f32 %v197, %v198
        %v200 = vrot.slane %v199, 1
        %v201 = vadd.f32 %v199, %v200
        %v202 = vld [vmem:[#allocation5] sm:$0xff]
        %v203 = vld [vmem:[#allocation5 + $0x8] sm:$0xff]
        %v204 = vld [vmem:[#allocation5 + $0x10] sm:$0xff]
        %v205 = vld [vmem:[#allocation5 + $0x18] sm:$0xff]
        %v206 = vld [vmem:[#allocation5 + $0x20] sm:$0xff]
        %v207 = vld [vmem:[#allocation5 + $0x28] sm:$0xff]
        %v208 = vld [vmem:[#allocation5 + $0x30] sm:$0xff]
        %v209 = vld [vmem:[#allocation5 + $0x38] sm:$0xff]
        %v210 = vld [vmem:[#allocation5 + $0x40] sm:$0xff]
        %v211 = vld [vmem:[#allocation5 + $0x48] sm:$0xff]
        %v212 = vld [vmem:[#allocation5 + $0x50] sm:$0xff]
        %v213 = vld [vmem:[#allocation5 + $0x58] sm:$0xff]
        %v214 = vld [vmem:[#allocation5 + $0x60] sm:$0xff]
        %v215 = vld [vmem:[#allocation5 + $0x68] sm:$0xff]
        %v216 = vld [vmem:[#allocation5 + $0x70] sm:$0xff]
        %v217 = vld [vmem:[#allocation5 + $0x78] sm:$0xff]
        %218 = vmatpush.msra.mxu0 %v217
        %219 = vmatpush.msra.mxu0 %v216
        %220 = vmatpush.msra.mxu0 %v215
        %221 = vmatpush.msra.mxu0 %v214
        %222 = vmatpush.msra.mxu0 %v213
        %223 = vmatpush.msra.mxu0 %v212
        %224 = vmatpush.msra.mxu0 %v211
        %225 = vmatpush.msra.mxu0 %v210
        %226 = vmatpush.msra.mxu0 %v209
        %227 = vmatpush.msra.mxu0 %v208
        %228 = vmatpush.msra.mxu0 %v207
        %229 = vmatpush.msra.mxu0 %v206
        %230 = vmatpush.msra.mxu0 %v205
        %231 = vmatpush.msra.mxu0 %v204
        %232 = vmatpush.msra.mxu0 %v203
        %233 = vmatpush.msra.mxu0 %v202
        %234 = vmatmul.f32.gmra.mxu0 %v201
        %v235 = vpop.f32.mrf.mxu0
        %v236 = vadd.f32 0.0, %v235
        %237 = vdwg.mxu0
        %v238 = vxor.u32 %v236, 2147483648
        %v239 = vmul.f32 %v238, 1.442695
        %v240 = vpow.pop %v239
        %v241 = vadd.f32 %v240, 1.0
        %v242 = vrcp.pop %v241
        %v243 = vmul.f32 %v241, %v242
        %v244 = vsub.f32 1.0, %v243
        %v245 = vmul.f32 %v242, %v244
        %v246 = vadd.f32 %v242, %v245
        %vm247 = vweird.f32 %v241
        %vm248 = vweird.f32 %v242
        %vm249 = vmor %vm247, %vm248
        %v250 = vsel %vm249, %v242, %v246
        %v251 = vand.u32 2147483647, %v241
        %vm252 = vcmp.eq.f32.partialorder %v251, 8.507059e+37
        %v253 = vand.u32 %v241, 2147483648
        %v254 = vor.u32 1.1754944e-38, %v253
        %v255 = vsel %vm252, %v254, %v250
        %v256 = vmul.f32 1.0, %v255
        %v257 = vperm.slane %v256, 0
        %v258 = vmul.f32 %v181, %v257
        %v259 = vmul.f32 %v182, %v257
        %v260 = vmul.f32 %v183, %v257
        %v261 = vmul.f32 %v184, %v257
        %v262 = vmul.f32 %v185, %v257
        %v263 = vmul.f32 %v186, %v257
        %v264 = vmul.f32 %v187, %v257
        %v265 = vmul.f32 %v188, %v257
        %266 = vst [vmem:[%s180] sm:$0xff] %v258
        %267 = vst [vmem:[%s180 + $0x8] sm:$0xff] %v259
        %268 = vst [vmem:[%s180 + $0x10] sm:$0xff] %v260
        %269 = vst [vmem:[%s180 + $0x18] sm:$0xff] %v261
        %270 = vst [vmem:[%s180 + $0x20] sm:$0xff] %v262
        %271 = vst [vmem:[%s180 + $0x28] sm:$0xff] %v263
        %272 = vst [vmem:[%s180 + $0x30] sm:$0xff] %v264
        %273 = vst [vmem:[%s180 + $0x38] sm:$0xff] %v265
        %s274 = sand.u32 %s75, 1
        %s275 = scalar_lea.sflag [#allocation4], %s274
        %s276 = sand.u32 %s75, 1
        %s277 = smul.addr %s276, 64
        %s278 = scalar_lea.vmem [#allocation7], %s277
        // Predicated region
        $region37: #{tpu_custom_call.1} parent=27 // pred_check
          %p279 = pneg %p85
        $region38: #{tpu_custom_call.1} parent=27 // pred_check_branch
          %281 = sbr.rel (%p279) target = $region40
        $region39: #{tpu_custom_call.1} parent=27 // pred_region
          %283 = vsyncadd %s275, 0
          %s284 = smul.addr %s20, 8
          %s285 = smul.addr %s284, 8
          %s286 = scalar_lea.hbm %s2, %s285
          %s287 = sshll.u32 %s278, 4
          %s288 = int_to_ptr.vmem [resolvable:$true] %s287
          %s289 = sshll.u32 %s286, 4
          %s290 = int_to_ptr.hbm [resolvable:$true] %s289
          %295 = dma.vmem_to_hbm [thread:$0]  %s288, 1024, %s290, %s275, 128, 128, 8
        $region40: #{tpu_custom_call.1} parent=27 // pred_fallthru
          _
      $region28: #{tpu_custom_call.1} parent=5 // pred_fallthru
        _
      %p296 = scmp.le.s32.totalorder 2, %s15
      // Predicated region
      $region41: #{tpu_custom_call.1} parent=5 // pred_check
        %p297 = pneg %p296
      $region42: #{tpu_custom_call.1} parent=5 // pred_check_branch
        %299 = sbr.rel (%p297) target = $region44
      $region43: #{tpu_custom_call.1} parent=5 // pred_region
        %s300 = ssub.s32 %s15, 2
        // Predicated region
        $region45: #{tpu_custom_call.1} parent=43 // pred_check
          %p301 = pneg %p91
        $region46: #{tpu_custom_call.1} parent=43 // pred_check_branch
          %303 = sbr.rel (%p301) target = $region48
        $region47: #{tpu_custom_call.1} parent=43 // pred_region
          %s304 = sand.u32 %s76, 1
          %s305 = scalar_lea.sflag [#allocation4], %s304
          %s306 = sand.u32 %s76, 1
          %s307 = smul.addr %s306, 64
          %s308 = scalar_lea.vmem [#allocation7], %s307
          %310 = dma.done %s305, 1024
        $region48: #{tpu_custom_call.1} parent=43 // pred_fallthru
          _
      $region44: #{tpu_custom_call.1} parent=5 // pred_fallthru
        _
    $region6: #{tpu_custom_call.1} parent=1 // loop_footer
      %s19 = sadd.s32 1, %s15
    $region7: #{tpu_custom_call.1} parent=1 // loop_footer_branch
      %14 = sbr.rel target = $region3
    $region8: #{tpu_custom_call.1} parent=1 // loop_exit
      _
    %311 = vsyncpa [#allocation3], 1
    %s312 = scalar_lea.sflag [#allocation3], 1
    %313 = vsyncpa %s312, 1
    %314 = vsyncpa [#allocation6], 1
    %315 = vsyncpa [#allocation4], 1
    %s316 = scalar_lea.sflag [#allocation4], 1
    %317 = vsyncpa %s316, 1

</llo_original>
